<compile_context>
chip_gen: v7x
topology: tpu7x:2x2x1
jax: 0.10.0
libtpu: 0.0.40
codegen_flags: <defaults>
</compile_context>

<pallas_src>
import math

import jax
import jax.numpy as jnp
from jax.experimental import pallas as pl
from jax.experimental.pallas import tpu as pltpu


def _leakage_kernel(x_ref, mask_ref, o_ref):
    # Mask block is either (1, tl) (numpy-broadcast over rows) or (tr, tl)
    # (pre-tiled per-row feature chunks). Pure VPU elementwise; memory-bound.
    o_ref[...] = x_ref[...] * mask_ref[...]


def _round_up(x, m):
    return ((x + m - 1) // m) * m


def _round_down(x, m):
    return (x // m) * m


def _divisors(n):
    divs = []
    i = 1
    while i * i <= n:
        if n % i == 0:
            divs.append(i)
            if i != n // i:
                divs.append(n // i)
        i += 1
    return sorted(divs)


def _pick_fold_factor(n_rows, m, sublane):
    """Fold factor R: view x as (N*R, M/R) with M/R a multiple of 128.

    Only used when the batch is smaller than the sublane alignment; picks the
    smallest R (so lanes stay wide) that restores full sublane occupancy.
    R is capped at 64 so lcm(R, sublane) and the mask replication stay small.
    """
    if n_rows >= sublane or m % 128 != 0:
        return 1
    q = m // 128
    cands = [r for r in _divisors(q) if r <= 64]
    good = [r for r in cands if n_rows * r >= sublane]
    if good:
        return min(good)
    if cands:
        return max(cands)
    return 1


def leakage_layer(x, mask, *, target_block_bytes=4 * 1024 * 1024):
    """x: (N, C, H, W), mask: (1, C, H, W) -> (N, C, H, W) = x * mask."""
    N, C, H, W = x.shape
    assert mask.shape == (1, C, H, W), f"mask shape {mask.shape} != (1,{C},{H},{W})"
    assert x.dtype == mask.dtype, f"dtype mismatch: x={x.dtype} mask={mask.dtype}"

    M = C * H * W
    itemsize = jnp.dtype(x.dtype).itemsize
    sublane = 8 * max(1, 4 // itemsize)  # f32 -> 8, bf16 -> 16, int8/fp8 -> 32

    # --- Sublane folding for small batch: (N, M) -> (N*R, M/R). ---
    R = _pick_fold_factor(N, M, sublane)
    rows = N * R
    L = M // R

    x2 = x.reshape(rows, L)       # row g = (sample g // R, feature-chunk g % R)
    m2 = mask.reshape(R, L)       # row r = feature-chunk r

    # --- Tile sizing from a per-block byte budget. ---
    # Row tile: multiple of lcm(R, sublane) -> sublane-aligned AND aligned to the
    # per-sample chunk count so the pre-tiled mask rows line up with x rows.
    row_align = R * sublane // math.gcd(R, sublane)
    row_cap = max(row_align, _round_down(512, row_align))
    tr = min(_round_up(rows, row_align), row_cap)

    # Lane tile: fill the byte budget, multiple of 128 (or full dim if tiny).
    if L < 128:
        tl = L
    else:
        tl = _round_down(max(target_block_bytes // (tr * itemsize), 128), 128)
        tl = max(128, min(tl, _round_up(L, 128)))

    n_lane = pl.cdiv(L, tl)
    n_row = pl.cdiv(rows, tr)

    # --- Mask presentation. ---
    if R == 1:
        mask_arr = m2                                          # (1, M)
        mask_spec = pl.BlockSpec((1, tl), lambda j, i: (0, j))  # broadcast over rows
        mask_block_rows = 1
    else:
        # Pre-tile the mask to exactly one row-tile of rows: row o holds
        # feature-chunk o % R, matching x rows i*tr + o (since R | tr).
        mask_arr = jnp.tile(m2, (tr // R, 1))                  # (tr, L)
        mask_spec = pl.BlockSpec((tr, tl), lambda j, i: (0, j))
        mask_block_rows = tr

    # --- VMEM budget: double-buffered x + out tiles plus the mask tile. ---
    block_bytes = tr * tl * itemsize
    mask_block_bytes = mask_block_rows * tl * itemsize
    vmem_needed = 4 * block_bytes + 2 * mask_block_bytes
    vmem_limit = min(48 * 1024 * 1024,
                     max(32 * 1024 * 1024, int(1.25 * vmem_needed) + (2 << 20)))

    out2 = pl.pallas_call(
        _leakage_kernel,
        out_shape=jax.ShapeDtypeStruct((rows, L), x.dtype),
        # Lane blocks outer / row blocks inner: the mask block index (0, j) is
        # constant across the fast (row) axis, so its DMA is skipped there.
        grid=(n_lane, n_row),
        in_specs=[
            pl.BlockSpec((tr, tl), lambda j, i: (i, j)),  # x tile
            mask_spec,                                    # mask tile
        ],
        out_specs=pl.BlockSpec((tr, tl), lambda j, i: (i, j)),
        compiler_params=pltpu.CompilerParams(
            dimension_semantics=("parallel", "parallel"),
            vmem_limit_bytes=vmem_limit,
        ),
        cost_estimate=pl.CostEstimate(
            flops=N * M,
            transcendentals=0,
            bytes_accessed=(2 * N * M + mask_arr.size) * itemsize,
        ),
    )(x2, mask_arr)
    return out2.reshape(N, C, H, W)


class LeakageLayerPallas:
    """Mirror of the PyTorch LeakageLayer: owns a (1, C, H, W) mask parameter."""

    def __init__(self, in_channels=3, in_size=(256, 512), key=None, dtype=jnp.float32):
        self.in_channels = in_channels
        self.in_size = tuple(in_size)
        h, w = self.in_size
        if key is None:
            key = jax.random.PRNGKey(0)
        # The PyTorch module leaves the mask uninitialized; use a deterministic
        # normal init here for a well-defined synthetic parameter.
        self.mask = jax.random.normal(key, (1, in_channels, h, w), dtype=dtype)

    def __call__(self, x):
        return leakage_layer(x, self.mask)


if __name__ == "__main__":
    key = jax.random.PRNGKey(0)
    kx, km, kx2, km2, kx3, km3, kx4, km4 = jax.random.split(key, 8)

    # 1) Primary small test (small-batch sublane-folding path, single block).
    N, C, H, W = 2, 4, 16, 16
    x = jax.random.normal(kx, (N, C, H, W), dtype=jnp.float32)
    layer = LeakageLayerPallas(in_channels=C, in_size=(H, W), key=km)
    out = jax.block_until_ready(layer(x))
    assert out.shape == (N, C, H, W)
    assert jnp.allclose(out, x * layer.mask, atol=1e-6, rtol=1e-6), "mismatch (primary)"

    # 2) Regime A, multi lane-block grid (small block budget to force >1 block).
    N2, C2, H2, W2 = 16, 3, 32, 64
    x_b = jax.random.normal(kx2, (N2, C2, H2, W2), dtype=jnp.float32)
    mask_b = jax.random.normal(km2, (1, C2, H2, W2), dtype=jnp.float32)
    out_b = jax.block_until_ready(leakage_layer(x_b, mask_b, target_block_bytes=64 * 1024))
    assert jnp.allclose(out_b, x_b * mask_b, atol=1e-6, rtol=1e-6), "mismatch (multi-block)"

    # 3) Folding path with ragged row blocks (rows not a multiple of the row tile).
    N3, C3, H3, W3 = 2, 3, 16, 16
    x_c = jax.random.normal(kx3, (N3, C3, H3, W3), dtype=jnp.float32)
    mask_c = jax.random.normal(km3, (1, C3, H3, W3), dtype=jnp.float32)
    out_c = jax.block_until_ready(leakage_layer(x_c, mask_c))
    assert jnp.allclose(out_c, x_c * mask_c, atol=1e-6, rtol=1e-6), "mismatch (folded ragged)"

    # 4) Ragged rows and lanes (M not a multiple of 128) -> cdiv-masked edge block.
    N4, C4, H4, W4 = 10, 3, 10, 10
    x_d = jax.random.normal(kx4, (N4, C4, H4, W4), dtype=jnp.float32)
    mask_d = jax.random.normal(km4, (1, C4, H4, W4), dtype=jnp.float32)
    out_d = jax.block_until_ready(leakage_layer(x_d, mask_d))
    assert jnp.allclose(out_d, x_d * mask_d, atol=1e-6, rtol=1e-6), "mismatch (ragged edges)"

    print("KERNEL_OK")
</pallas_src>

<mosaic_0001>
module attributes {stable_mosaic.version = 11 : i64} {
  func.func @_leakage_kernel(%arg0: i32, %arg1: i32, %arg2: memref<8x256xf32, #tpu.memory_space<vmem>>, %arg3: memref<8x256xf32, #tpu.memory_space<vmem>>, %arg4: memref<8x256xf32, #tpu.memory_space<vmem>>) attributes {dimension_semantics = [#tpu.dimension_semantics<parallel>, #tpu.dimension_semantics<parallel>], iteration_bounds = array<i64: 1, 1>, scalar_prefetch = 0 : i64, scratch_operands = 0 : i64, tpu.core_type = #tpu.core_type<tc>, window_params = [{transform_indices = @transform_0, window_bounds = array<i64: 8, 256>}, {transform_indices = @transform_1, window_bounds = array<i64: 8, 256>}, {transform_indices = @transform_2, window_bounds = array<i64: 8, 256>}]} {
    %c0 = arith.constant 0 : index
    %c0_0 = arith.constant 0 : index
    %0 = vector.load %arg2[%c0, %c0_0] : memref<8x256xf32, #tpu.memory_space<vmem>>, vector<8x256xf32>
    %c0_1 = arith.constant 0 : index
    %c0_2 = arith.constant 0 : index
    %1 = vector.load %arg3[%c0_1, %c0_2] : memref<8x256xf32, #tpu.memory_space<vmem>>, vector<8x256xf32>
    %2 = arith.mulf %0, %1 : vector<8x256xf32>
    %c0_3 = arith.constant 0 : index
    %c0_4 = arith.constant 0 : index
    %3 = vector.load %arg4[%c0_3, %c0_4] : memref<8x256xf32, #tpu.memory_space<vmem>>, vector<8x256xf32>
    tpu.vector_store %arg4[%c0_3, %c0_4], %2 {strides = array<i32>} : memref<8x256xf32, #tpu.memory_space<vmem>>, vector<8x256xf32>,
    return
  }
  func.func @transform_0(%arg0: i32, %arg1: i32) -> (i32, i32) {
    %c0_i32 = arith.constant 0 : i32
    return %arg1, %arg0 : i32, i32
  }
  func.func @transform_1(%arg0: i32, %arg1: i32) -> (i32, i32) {
    %c0_i32 = arith.constant 0 : i32
    %c0_i32_0 = arith.constant 0 : i32
    return %c0_i32, %arg0 : i32, i32
  }
  func.func @transform_2(%arg0: i32, %arg1: i32) -> (i32, i32) {
    %c0_i32 = arith.constant 0 : i32
    return %arg1, %arg0 : i32, i32
  }
}

</mosaic_0001>

<llo_original>
// kernel: tpu_custom_call.1
$region0: #{tpu_custom_call.1}
  #allocation0 [shape = 'u32[]', space=smem, size = 0x4, offset = 0x4, fixed_abs, tag = 'smem constant byte address 0x4 - core index']
  #allocation1 [shape = 'u32[144,128]{1,0:T(1,128)}', space=vmem, size = 0x12000, scoped, tag = 'internal scratch']
  %s0 = inlined_call_operand.hbm [shape: f32[8,256], index: 0, kind: input, shape index: {}]
  %s1 = inlined_call_operand.hbm [shape: f32[8,256], index: 1, kind: input, shape index: {}]
  %s2 = inlined_call_operand.hbm [shape: f32[8,256], index: 2, kind: output, shape index: {}]
  %s3 = sld [smem:[#allocation0]]
  $region26: #{tpu_custom_call.1} parent=0
    _
  %s5 = ssub.s32 1, %s3
  %s6 = scalar_select 0, %s5, %s3
  $region1: #{tpu_custom_call.1} parent=0
    #allocation2 [shape = 'u8[8192]{0}', space=vmem, size = 0x2000, scoped, tag = 'input window, operand 0, single buffered']
    #allocation3 [shape = 's32[1]{0}', space=sflag, size = 0x4, scoped, tag = 'scoped memory for tpu_custom_call.1']
    #allocation4 [shape = 's32[1]{0}', space=sflag, size = 0x4, scoped, tag = 'scoped memory for tpu_custom_call.1']
    #allocation5 [shape = 'u8[8192]{0}', space=vmem, size = 0x2000, scoped, tag = 'input window, operand 1, single buffered']
    #allocation6 [shape = 's32[1]{0}', space=sflag, size = 0x4, scoped, tag = 'scoped memory for tpu_custom_call.1']
    #allocation7 [shape = 'u8[8192]{0}', space=vmem, size = 0x2000, scoped, tag = 'output window, operand 0, single buffered']
    %7 = vsyncpa [#allocation3], 0
    %8 = vsyncpa [#allocation6], 0
    %9 = vsyncpa [#allocation4], 0
    // Predicated region
    $region2: #{tpu_custom_call.1} parent=1 // pred_check
      _
    $region3: #{tpu_custom_call.1} parent=1 // pred_check_branch
      %11 = sbr.rel (0) target = $region5
    $region4: #{tpu_custom_call.1} parent=1 // pred_region
      %s13 = ssub.s32 256, 256
      %14 = vsyncadd [#allocation3], %s13
      %s16 = sshll.u32 [#allocation2], 4
      %s17 = int_to_ptr.vmem [resolvable:$true] %s16
      %19 = dma.hbm_to_vmem [thread:$0]  %s0, 256, %s17, [#allocation3]
    $region5: #{tpu_custom_call.1} parent=1 // pred_fallthru
      _
    // Predicated region
    $region6: #{tpu_custom_call.1} parent=1 // pred_check
      _
    $region7: #{tpu_custom_call.1} parent=1 // pred_check_branch
      %21 = sbr.rel (0) target = $region9
    $region8: #{tpu_custom_call.1} parent=1 // pred_region
      %s23 = ssub.s32 256, 256
      %24 = vsyncadd [#allocation6], %s23
      %s26 = sshll.u32 [#allocation5], 4
      %s27 = int_to_ptr.vmem [resolvable:$true] %s26
      %29 = dma.hbm_to_vmem [thread:$0]  %s1, 256, %s27, [#allocation6]
    $region9: #{tpu_custom_call.1} parent=1 // pred_fallthru
      _
    // Predicated region
    $region10: #{tpu_custom_call.1} parent=1 // pred_check
      _
    $region11: #{tpu_custom_call.1} parent=1 // pred_check_branch
      %31 = sbr.rel (0) target = $region13
    $region12: #{tpu_custom_call.1} parent=1 // pred_region
      %32 = dma.done [#allocation3], 256
    $region13: #{tpu_custom_call.1} parent=1 // pred_fallthru
      _
    // Predicated region
    $region14: #{tpu_custom_call.1} parent=1 // pred_check
      _
    $region15: #{tpu_custom_call.1} parent=1 // pred_check_branch
      %34 = sbr.rel (0) target = $region17
    $region16: #{tpu_custom_call.1} parent=1 // pred_region
      %35 = dma.done [#allocation6], 256
    $region17: #{tpu_custom_call.1} parent=1 // pred_fallthru
      _
    %v36 = vld [vmem:[#allocation2] sm:$0xff]
    %v37 = vld [vmem:[#allocation2 + $0x8] sm:$0xff]
    %v38 = vld [vmem:[#allocation5] sm:$0xff]
    %v39 = vld [vmem:[#allocation5 + $0x8] sm:$0xff]
    %v40 = vmul.f32 %v36, %v38
    %v41 = vmul.f32 %v37, %v39
    %42 = vst [vmem:[#allocation7] sm:$0xff] %v40
    %43 = vst [vmem:[#allocation7 + $0x8] sm:$0xff] %v41
    // Predicated region
    $region18: #{tpu_custom_call.1} parent=1 // pred_check
      _
    $region19: #{tpu_custom_call.1} parent=1 // pred_check_branch
      %45 = sbr.rel (0) target = $region21
    $region20: #{tpu_custom_call.1} parent=1 // pred_region
      %s47 = ssub.s32 256, 256
      %48 = vsyncadd [#allocation4], %s47
      %s50 = sshll.u32 [#allocation7], 4
      %s51 = int_to_ptr.vmem [resolvable:$true] %s50
      %53 = dma.vmem_to_hbm [thread:$0]  %s51, 256, %s2, [#allocation4]
    $region21: #{tpu_custom_call.1} parent=1 // pred_fallthru
      _
    // Predicated region
    $region22: #{tpu_custom_call.1} parent=1 // pred_check
      _
    $region23: #{tpu_custom_call.1} parent=1 // pred_check_branch
      %55 = sbr.rel (0) target = $region25
    $region24: #{tpu_custom_call.1} parent=1 // pred_region
      %56 = dma.done [#allocation4], 256
    $region25: #{tpu_custom_call.1} parent=1 // pred_fallthru
      _
    %57 = vsyncpa [#allocation3], 1
    %58 = vsyncpa [#allocation6], 1
    %59 = vsyncpa [#allocation4], 1

</llo_original>
